<compile_context>
chip_gen: v5e
topology: v5e:2x2
jax: 0.10.0
libtpu: 0.0.40
codegen_flags: <defaults>
</compile_context>

<pallas_src>
import jax
import jax.numpy as jnp
from jax import lax
from jax.experimental import pallas as pl
from jax.experimental.pallas import tpu as pltpu


LANES = 128
SUBLANES = 8
CHUNK_ROWS = 256        # rows per inner accumulation chunk (multiple of 32)
MAX_BLOCK_ROWS = 4096   # 4096 * 128 * 4 B = 2 MiB per f32 input buffer
TARGET_STEPS = 8        # aim for >= ~8 grid steps when the input is big enough


def _dice_partials_kernel(x_ref, y_ref, out_ref):
    """Per-block partial sums for DiceLoss.

    x_ref, y_ref : (block_rows, 128) tiles of flattened logits / targets.
    out_ref      : (8, 256) lane-dense partials for this grid step:
                   [:, :128] = sum(p*t) fold, [:, 128:] = sum(p + t) fold.
    """
    rows, lanes = x_ref.shape          # static python ints
    chunk = min(CHUNK_ROWS, rows)
    n_full = rows // chunk
    rem = rows - n_full * chunk        # static; multiple of the row unit

    def chunk_sums(off, nrows):
        x = x_ref[pl.ds(off, nrows), :].astype(jnp.float32)
        y = y_ref[pl.ds(off, nrows), :].astype(jnp.float32)
        # sigmoid via EUP tanh (same expansion XLA uses for lax.logistic);
        # keeps the divide off the binding VALU slots.
        p = 0.5 * jnp.tanh(0.5 * x) + 0.5
        # (nrows,128) -> (nrows//8, 8, 128) --sum axis 0--> (8,128).
        # Layout-compatible reshape; pure vreg adds, no cross-lane XLU work.
        inter = (p * y).reshape(nrows // SUBLANES, SUBLANES, lanes).sum(axis=0)
        denom = (p + y).reshape(nrows // SUBLANES, SUBLANES, lanes).sum(axis=0)
        return inter, denom

    inter, denom = chunk_sums(0, chunk)

    if n_full > 1:
        def body(c, carry):
            ia, da = carry
            off = pl.multiple_of(c * chunk, chunk)
            ic, dc = chunk_sums(off, chunk)
            return ia + ic, da + dc
        inter, denom = lax.fori_loop(1, n_full, body, (inter, denom))

    if rem:
        ic, dc = chunk_sums(n_full * chunk, rem)
        inter = inter + ic
        denom = denom + dc

    out_ref[:, :lanes] = inter
    out_ref[:, lanes:] = denom


def dice_loss(inputs, targets, smooth=1.0):
    """Pallas equivalent of DiceLoss.forward. Returns a float32 scalar."""
    assert inputs.shape == targets.shape

    x = jnp.ravel(inputs)
    y = jnp.ravel(targets)
    if not jnp.issubdtype(x.dtype, jnp.floating):
        x = x.astype(jnp.float32)
    if not jnp.issubdtype(y.dtype, jnp.floating):
        y = y.astype(jnp.float32)

    n = x.shape[0]

    def cdiv(a, b):
        return -(-a // b)

    def pack(dt):
        return max(1, 4 // jnp.dtype(dt).itemsize)

    # Row granularity: packed sublane count (8 f32 / 16 bf16 / 32 int8).
    row_unit = SUBLANES * max(pack(x.dtype), pack(y.dtype))

    rows_min = cdiv(n, LANES)
    rows_min = cdiv(rows_min, row_unit) * row_unit

    # Block sizing: enough grid steps for pipelining / v7x dual-TC split,
    # padding bounded to < row_unit per step, block capped at 2 MiB (f32).
    grid_target = max(1, min(TARGET_STEPS, rows_min // CHUNK_ROWS))
    block_rows = cdiv(cdiv(rows_min, grid_target), row_unit) * row_unit
    block_rows = min(block_rows, MAX_BLOCK_ROWS)
    grid = cdiv(rows_min, block_rows)
    rows = grid * block_rows

    n_pad = rows * LANES
    if n_pad != n:
        # Pad logits with a huge negative value (sigmoid == 0 exactly) and
        # targets with 0, so padded slots contribute nothing to any sum --
        # no in-kernel mask needed.
        neg = float(jnp.finfo(x.dtype).min) / 2
        x = jnp.pad(x, (0, n_pad - n), constant_values=neg)
        y = jnp.pad(y, (0, n_pad - n), constant_values=0)

    x2 = x.reshape(rows, LANES)
    y2 = y.reshape(rows, LANES)

    out = pl.pallas_call(
        _dice_partials_kernel,
        out_shape=jax.ShapeDtypeStruct((SUBLANES, grid * 2 * LANES), jnp.float32),
        grid_spec=pltpu.PrefetchScalarGridSpec(
            num_scalar_prefetch=0,
            grid=(grid,),
            in_specs=[
                pl.BlockSpec((block_rows, LANES), lambda i: (i, 0)),
                pl.BlockSpec((block_rows, LANES), lambda i: (i, 0)),
            ],
            out_specs=pl.BlockSpec((SUBLANES, 2 * LANES), lambda i: (0, i)),
        ),
        compiler_params=pltpu.CompilerParams(
            dimension_semantics=("parallel",),
        ),
    )(x2, y2)

    # Tiny final reduction + dice ratio in the wrapper.
    parts = out.reshape(SUBLANES, grid, 2, LANES)
    inter_sum = jnp.sum(parts[:, :, 0, :])
    denom_sum = jnp.sum(parts[:, :, 1, :])   # == sum(p) + sum(t)
    dice = (2.0 * inter_sum + smooth) / (denom_sum + smooth)
    return 1.0 - dice


if __name__ == "__main__":
    key = jax.random.PRNGKey(0)
    k1, k2 = jax.random.split(key)

    # Small NCHW shapes consistent with a segmentation-style loss input.
    B, C, H, W = 2, 4, 16, 16
    inputs = jax.random.normal(k1, (B, C, H, W), dtype=jnp.float32)   # logits
    targets = (jax.random.uniform(k2, (B, C, H, W)) > 0.5).astype(jnp.float32)

    result = dice_loss(inputs, targets)
    jax.block_until_ready(result)

    # Pure-JAX reference check.
    p = jax.nn.sigmoid(inputs.astype(jnp.float32)).ravel()
    t = targets.astype(jnp.float32).ravel()
    inter = jnp.sum(p * t)
    ref = 1.0 - (2.0 * inter + 1.0) / (jnp.sum(p) + jnp.sum(t) + 1.0)

    assert jnp.allclose(result, ref, rtol=1e-5, atol=1e-6), (
        float(result), float(ref))
    print("KERNEL_OK")
</pallas_src>

<mosaic_0001>
module attributes {stable_mosaic.version = 11 : i64} {
  func.func @_dice_partials_kernel(%arg0: i32, %arg1: memref<16x128xf32, #tpu.memory_space<vmem>>, %arg2: memref<16x128xf32, #tpu.memory_space<vmem>>, %arg3: memref<8x256xf32, #tpu.memory_space<vmem>>) attributes {dimension_semantics = [#tpu.dimension_semantics<parallel>], iteration_bounds = array<i64: 1>, scalar_prefetch = 0 : i64, scratch_operands = 0 : i64, tpu.core_type = #tpu.core_type<tc>, window_params = [{transform_indices = @transform_0, window_bounds = array<i64: 16, 128>}, {transform_indices = @transform_1, window_bounds = array<i64: 16, 128>}, {transform_indices = @transform_2, window_bounds = array<i64: 8, 256>}]} {
    %c0 = arith.constant 0 : index
    %c0_0 = arith.constant 0 : index
    %0 = vector.load %arg1[%c0, %c0_0] : memref<16x128xf32, #tpu.memory_space<vmem>>, vector<16x128xf32>
    %c0_1 = arith.constant 0 : index
    %c0_2 = arith.constant 0 : index
    %1 = vector.load %arg2[%c0_1, %c0_2] : memref<16x128xf32, #tpu.memory_space<vmem>>, vector<16x128xf32>
    %cst = arith.constant 5.000000e-01 : f32
    %2 = vector.broadcast %cst : f32 to vector<16x128xf32>
    %3 = arith.mulf %2, %0 : vector<16x128xf32>
    %4 = math.tanh %3 : vector<16x128xf32>
    %cst_3 = arith.constant 5.000000e-01 : f32
    %5 = vector.broadcast %cst_3 : f32 to vector<16x128xf32>
    %6 = arith.mulf %5, %4 : vector<16x128xf32>
    %cst_4 = arith.constant 5.000000e-01 : f32
    %7 = vector.broadcast %cst_4 : f32 to vector<16x128xf32>
    %8 = arith.addf %6, %7 : vector<16x128xf32>
    %9 = arith.mulf %8, %1 : vector<16x128xf32>
    %10 = vector.shape_cast %9 : vector<16x128xf32> to vector<2x8x128xf32>
    %cst_5 = arith.constant dense<0.000000e+00> : vector<8x128xf32>
    %11 = vector.multi_reduction <add>, %10, %cst_5 [0] : vector<2x8x128xf32> to vector<8x128xf32>
    %12 = arith.addf %8, %1 : vector<16x128xf32>
    %13 = vector.shape_cast %12 : vector<16x128xf32> to vector<2x8x128xf32>
    %cst_6 = arith.constant dense<0.000000e+00> : vector<8x128xf32>
    %14 = vector.multi_reduction <add>, %13, %cst_6 [0] : vector<2x8x128xf32> to vector<8x128xf32>
    %c0_7 = arith.constant 0 : index
    %c0_8 = arith.constant 0 : index
    %15 = vector.load %arg3[%c0_7, %c0_8] : memref<8x256xf32, #tpu.memory_space<vmem>>, vector<8x128xf32>
    tpu.vector_store %arg3[%c0_7, %c0_8], %11 {strides = array<i32>} : memref<8x256xf32, #tpu.memory_space<vmem>>, vector<8x128xf32>,
    %c0_9 = arith.constant 0 : index
    %c128 = arith.constant 128 : index
    %16 = vector.load %arg3[%c0_9, %c128] : memref<8x256xf32, #tpu.memory_space<vmem>>, vector<8x128xf32>
    tpu.vector_store %arg3[%c0_9, %c128], %14 {strides = array<i32>} : memref<8x256xf32, #tpu.memory_space<vmem>>, vector<8x128xf32>,
    return
  }
  func.func @transform_0(%arg0: i32) -> (i32, i32) {
    %c0_i32 = arith.constant 0 : i32
    %c0_i32_0 = arith.constant 0 : i32
    return %arg0, %c0_i32 : i32, i32
  }
  func.func @transform_1(%arg0: i32) -> (i32, i32) {
    %c0_i32 = arith.constant 0 : i32
    %c0_i32_0 = arith.constant 0 : i32
    return %arg0, %c0_i32 : i32, i32
  }
  func.func @transform_2(%arg0: i32) -> (i32, i32) {
    %c0_i32 = arith.constant 0 : i32
    %c0_i32_0 = arith.constant 0 : i32
    return %c0_i32, %arg0 : i32, i32
  }
}

</mosaic_0001>

<llo_original>
// kernel: tpu_custom_call.1
$region0: #{tpu_custom_call.1}
  #allocation0 [shape = 'u32[]', space=smem, size = 0x4, offset = 0x4, fixed_abs, tag = 'smem constant byte address 0x4 - core index']
  #allocation1 [shape = 'u32[72,128]{1,0:T(1,128)}', space=vmem, size = 0x9000, scoped, tag = 'internal scratch']
  %s0 = inlined_call_operand.hbm [shape: f32[16,128], index: 0, kind: input, shape index: {}]
  %s1 = inlined_call_operand.hbm [shape: f32[16,128], index: 1, kind: input, shape index: {}]
  %s2 = inlined_call_operand.hbm [shape: f32[8,256], index: 2, kind: output, shape index: {}]
  %s3 = sld [smem:[#allocation0]]
  $region26: #{tpu_custom_call.1} parent=0
    _
  %s5 = ssub.s32 1, %s3
  %s6 = scalar_select 0, %s5, %s3
  $region1: #{tpu_custom_call.1} parent=0
    #allocation2 [shape = 'u8[8192]{0}', space=vmem, size = 0x2000, scoped, tag = 'input window, operand 0, single buffered']
    #allocation3 [shape = 's32[1]{0}', space=sflag, size = 0x4, scoped, tag = 'scoped memory for tpu_custom_call.1']
    #allocation4 [shape = 's32[1]{0}', space=sflag, size = 0x4, scoped, tag = 'scoped memory for tpu_custom_call.1']
    #allocation5 [shape = 'u8[8192]{0}', space=vmem, size = 0x2000, scoped, tag = 'input window, operand 1, single buffered']
    #allocation6 [shape = 's32[1]{0}', space=sflag, size = 0x4, scoped, tag = 'scoped memory for tpu_custom_call.1']
    #allocation7 [shape = 'u8[8192]{0}', space=vmem, size = 0x2000, scoped, tag = 'output window, operand 0, single buffered']
    %7 = vsyncpa [#allocation3], 0
    %8 = vsyncpa [#allocation6], 0
    %9 = vsyncpa [#allocation4], 0
    // Predicated region
    $region2: #{tpu_custom_call.1} parent=1 // pred_check
      _
    $region3: #{tpu_custom_call.1} parent=1 // pred_check_branch
      %11 = sbr.rel (0) target = $region5
    $region4: #{tpu_custom_call.1} parent=1 // pred_region
      %13 = vsyncadd [#allocation3], 0
      %s14 = sshll.u32 %s0, 4
      %s15 = int_to_ptr.hbm [resolvable:$true] %s14
      %s16 = sshll.u32 [#allocation2], 4
      %s17 = int_to_ptr.vmem [resolvable:$true] %s16
      %22 = dma.hbm_to_vmem [thread:$0]  %s15, 256, %s17, [#allocation3], 128, 128, 8
    $region5: #{tpu_custom_call.1} parent=1 // pred_fallthru
      _
    // Predicated region
    $region6: #{tpu_custom_call.1} parent=1 // pred_check
      _
    $region7: #{tpu_custom_call.1} parent=1 // pred_check_branch
      %24 = sbr.rel (0) target = $region9
    $region8: #{tpu_custom_call.1} parent=1 // pred_region
      %26 = vsyncadd [#allocation6], 0
      %s27 = sshll.u32 %s1, 4
      %s28 = int_to_ptr.hbm [resolvable:$true] %s27
      %s29 = sshll.u32 [#allocation5], 4
      %s30 = int_to_ptr.vmem [resolvable:$true] %s29
      %35 = dma.hbm_to_vmem [thread:$0]  %s28, 256, %s30, [#allocation6], 128, 128, 8
    $region9: #{tpu_custom_call.1} parent=1 // pred_fallthru
      _
    // Predicated region
    $region10: #{tpu_custom_call.1} parent=1 // pred_check
      _
    $region11: #{tpu_custom_call.1} parent=1 // pred_check_branch
      %37 = sbr.rel (0) target = $region13
    $region12: #{tpu_custom_call.1} parent=1 // pred_region
      %39 = dma.done [#allocation3], 256
    $region13: #{tpu_custom_call.1} parent=1 // pred_fallthru
      _
    // Predicated region
    $region14: #{tpu_custom_call.1} parent=1 // pred_check
      _
    $region15: #{tpu_custom_call.1} parent=1 // pred_check_branch
      %41 = sbr.rel (0) target = $region17
    $region16: #{tpu_custom_call.1} parent=1 // pred_region
      %43 = dma.done [#allocation6], 256
    $region17: #{tpu_custom_call.1} parent=1 // pred_fallthru
      _
    %v44 = vld [vmem:[#allocation2] sm:$0xff]
    %v45 = vld [vmem:[#allocation2 + $0x8] sm:$0xff]
    %v46 = vld [vmem:[#allocation5] sm:$0xff]
    %v47 = vld [vmem:[#allocation5 + $0x8] sm:$0xff]
    %v48 = vmul.f32 %v44, 0.5
    %v49 = vmul.f32 %v45, 0.5
    %v50 = vtanh.pop %v48
    %v51 = vtanh.pop %v49
    %v52 = vmul.f32 %v50, 0.5
    %v53 = vmul.f32 %v51, 0.5
    %v54 = vadd.f32 %v52, 0.5
    %v55 = vadd.f32 %v53, 0.5
    %v56 = vmul.f32 %v54, %v46
    %v57 = vmul.f32 %v55, %v47
    %v58 = vadd.f32 %v56, %v57
    %v59 = vadd.f32 %v54, %v46
    %v60 = vadd.f32 %v55, %v47
    %v61 = vadd.f32 %v59, %v60
    %62 = vst [vmem:[#allocation7] sm:$0xff] %v58
    %63 = vst [vmem:[#allocation7 + $0x8] sm:$0xff] %v61
    // Predicated region
    $region18: #{tpu_custom_call.1} parent=1 // pred_check
      _
    $region19: #{tpu_custom_call.1} parent=1 // pred_check_branch
      %65 = sbr.rel (0) target = $region21
    $region20: #{tpu_custom_call.1} parent=1 // pred_region
      %67 = vsyncadd [#allocation4], 0
      %s69 = sshll.u32 [#allocation7], 4
      %s70 = int_to_ptr.vmem [resolvable:$true] %s69
      %s71 = sshll.u32 %s2, 4
      %s72 = int_to_ptr.hbm [resolvable:$true] %s71
      %74 = dma.vmem_to_hbm [thread:$0]  %s70, 256, %s72, [#allocation4]
    $region21: #{tpu_custom_call.1} parent=1 // pred_fallthru
      _
    // Predicated region
    $region22: #{tpu_custom_call.1} parent=1 // pred_check
      _
    $region23: #{tpu_custom_call.1} parent=1 // pred_check_branch
      %76 = sbr.rel (0) target = $region25
    $region24: #{tpu_custom_call.1} parent=1 // pred_region
      %78 = dma.done [#allocation4], 256
    $region25: #{tpu_custom_call.1} parent=1 // pred_fallthru
      _
    %79 = vsyncpa [#allocation3], 1
    %80 = vsyncpa [#allocation6], 1
    %81 = vsyncpa [#allocation4], 1

</llo_original>
